<compile_context>
chip_gen: v5e
topology: v5e:2x2
jax: 0.10.0
libtpu: 0.0.40
codegen_flags: <defaults>
</compile_context>

<pallas_src>
import functools

import jax
import jax.numpy as jnp
from jax.experimental import pallas as pl
from jax.experimental.pallas import tpu as pltpu

_LANE = 128
_SUBLANE = 8
_MAX_TILE = 4096              # lanes per grid step (multiple of 128)
_BLOCK_ELEMS = 1024 * 1024    # ~4 MiB of f32 per input block per grid step


def _num_tensorcores_per_chip():
    """Best-effort detection: v7x exposes 2 TensorCores per chip."""
    try:
        kind = (jax.devices()[0].device_kind or "").lower()
    except Exception:
        return 1
    return 2 if ("7x" in kind or "v7" in kind) else 1


def _fold_lanes(v, width):
    """Reduce (rows, k*width) -> (rows, width) with aligned VPU adds.

    Uses pairwise halving (log-depth add chain) while the column count admits
    width-aligned halves, then a short linear fold for any leftover factor.
    """
    cols = v.shape[1]
    if cols == width:
        return v
    while cols > width and cols % (2 * width) == 0:
        half = cols // 2
        v = v[:, :half] + v[:, half:]
        cols = half
    if cols != width:
        acc = v[:, :width]
        for s in range(width, cols, width):
            acc = acc + v[:, s:s + width]
        v = acc
    return v


def _dice_kernel(x_ref, t_ref, inter_ref, union_ref, inter_acc, union_acc, *,
                 n_cols, tile, out_w):
    k = pl.program_id(1)
    n_k = pl.num_programs(1)

    @pl.when(k == 0)
    def _init():
        inter_acc[...] = jnp.zeros_like(inter_acc)
        union_acc[...] = jnp.zeros_like(union_acc)

    def _accumulate(mask_tail):
        x = x_ref[...].astype(jnp.float32)
        # sigmoid(x) = 0.5*(tanh(x/2)+1): single EUP push + 2 cheap VALU ops.
        probs = 0.5 * (jnp.tanh(0.5 * x) + 1.0)
        tgt = t_ref[...].astype(jnp.float32)
        if mask_tail:
            # Zero the out-of-bounds columns of the ragged last spatial tile
            # (after the tanh, so padded garbage / NaNs are discarded).
            col = k * tile + jax.lax.broadcasted_iota(jnp.int32, probs.shape, 1)
            keep = col < n_cols
            probs = jnp.where(keep, probs, 0.0)
            tgt = jnp.where(keep, tgt, 0.0)
        # Per-step tree fold to narrow, lane-dense accumulators: ~0 vst/elem.
        inter_acc[...] += _fold_lanes(probs * tgt, out_w)
        union_acc[...] += _fold_lanes(probs + tgt, out_w)

    if n_cols % tile == 0:
        _accumulate(False)                   # no ragged tail: no masking at all
    else:
        @pl.when(k < n_k - 1)
        def _body():
            _accumulate(False)

        @pl.when(k == n_k - 1)
        def _tail():
            _accumulate(True)

    @pl.when(k == n_k - 1)
    def _finish():
        inter_ref[...] = inter_acc[...]
        union_ref[...] = union_acc[...]


def dice_loss(logits, targets, eps=1e-6):
    """DiceLoss.forward: logits/targets are (N, C, H, W)."""
    N, C, H, W = logits.shape
    NC, HW = N * C, H * W

    # (N, C, H, W) -> (NC, HW): free row-major reshape; keep native dtypes
    # (casts happen on load inside the kernel; bf16/int8 targets welcome).
    x = logits.reshape(NC, HW)
    t = targets.reshape(NC, HW)

    # Fold spatial into the row (sublane) axis when there are few (n, c) rows,
    # so every grid step streams MiB-scale blocks with full vregs.
    fold = 1
    while (NC * fold < 256 and HW % (2 * fold) == 0
           and HW // (2 * fold) >= _MAX_TILE):
        fold *= 2
    R, L = NC * fold, HW // fold
    if fold > 1:
        x = x.reshape(R, L)
        t = t.reshape(R, L)

    # ---- spatial (lane) tile ----
    if L <= _MAX_TILE:
        tile = L                         # full dim: always legal, no masking
    else:
        # Prefer the largest multiple-of-128 divisor of L: no ragged tail.
        tile = 0
        for cand in range(_MAX_TILE, 0, -_LANE):
            if L % cand == 0:
                tile = cand
                break
        if tile == 0:
            tile = _MAX_TILE             # ragged tail, masked in-kernel
    n_spatial = pl.cdiv(L, tile)

    # ---- row (sublane) tile ----
    num_tc = _num_tensorcores_per_chip()
    if R < _SUBLANE:
        row_tile = R                     # full dim (legal even when < 8)
    else:
        rows_cap = (R // _SUBLANE) * _SUBLANE
        rows_want = max(_SUBLANE, (_BLOCK_ELEMS // tile) // _SUBLANE * _SUBLANE)
        row_tile = min(rows_cap, rows_want)
        if num_tc > 1 and R >= num_tc * _SUBLANE:
            # Multi-TensorCore chip (v7x): keep the number of row blocks a
            # multiple of the core count so the "parallel" axis shards evenly.
            blocks = pl.cdiv(R, row_tile)
            blocks = pl.cdiv(blocks, num_tc) * num_tc
            row_tile = max(_SUBLANE,
                           pl.cdiv(pl.cdiv(R, blocks), _SUBLANE) * _SUBLANE)
        # On 1-TC chips (v5e/v6e) we deliberately keep the full row block:
        # splitting only shrinks the bytes moved per step for zero benefit.
    n_rows = pl.cdiv(R, row_tile)

    out_w = _LANE if tile % _LANE == 0 else tile
    out_rows = n_rows * row_tile

    kernel = functools.partial(_dice_kernel, n_cols=L, tile=tile, out_w=out_w)

    # Explicit VMEM budget: 2 double-buffered inputs + elementwise temporaries
    # + narrow accumulators/outputs.  Capped below v7x's 64 MiB physical VMEM.
    block = row_tile * tile
    vmem_bytes = (2 * block * (x.dtype.itemsize + t.dtype.itemsize)
                  + 6 * block * 4
                  + 4 * row_tile * out_w * 4)
    vmem_limit = min(int(1.5 * vmem_bytes) + (2 << 20), 56 * 1024 * 1024)

    in_spec = pl.BlockSpec((row_tile, tile), lambda i, k: (i, k))
    out_spec = pl.BlockSpec((row_tile, out_w), lambda i, k: (i, 0))

    inter_p, union_p = pl.pallas_call(
        kernel,
        out_shape=(jax.ShapeDtypeStruct((out_rows, out_w), jnp.float32),
                   jax.ShapeDtypeStruct((out_rows, out_w), jnp.float32)),
        grid_spec=pltpu.PrefetchScalarGridSpec(
            num_scalar_prefetch=0,
            grid=(n_rows, n_spatial),
            in_specs=[in_spec, in_spec],
            out_specs=[out_spec, out_spec],
            scratch_shapes=[pltpu.VMEM((row_tile, out_w), jnp.float32),
                            pltpu.VMEM((row_tile, out_w), jnp.float32)],
        ),
        compiler_params=pltpu.CompilerParams(
            dimension_semantics=("parallel", "arbitrary"),
            vmem_limit_bytes=vmem_limit),
    )(x, t)

    # Tiny plain-JAX epilogue: drop padded rows (rows >= R carry edge-block
    # garbage by design and never contaminate valid rows), fold the lane /
    # spatial-fold partials per (n, c), then dice + mean.
    inter = inter_p[:R].reshape(NC, -1).sum(axis=1)
    union = union_p[:R].reshape(NC, -1).sum(axis=1)
    dice = (2.0 * inter + eps) / (union + eps)
    return 1.0 - jnp.mean(dice)


def dice_loss_ref(logits, targets, eps=1e-6):
    probs = jax.nn.sigmoid(logits.astype(jnp.float32))
    t = targets.astype(jnp.float32)
    inter = jnp.sum(probs * t, axis=(2, 3))
    union = jnp.sum(probs, axis=(2, 3)) + jnp.sum(t, axis=(2, 3))
    dice = (2.0 * inter + eps) / (union + eps)
    return 1.0 - jnp.mean(dice)


if __name__ == "__main__":
    key = jax.random.PRNGKey(0)

    # Primary check at the spec's small shape.
    k1, k2 = jax.random.split(key)
    N, C, H, W = 2, 4, 16, 16
    logits = jax.random.normal(k1, (N, C, H, W), dtype=jnp.float32)
    targets = (jax.random.uniform(k2, (N, C, H, W)) > 0.5).astype(jnp.float32)

    out = jax.block_until_ready(dice_loss(logits, targets))
    ref = jax.block_until_ready(dice_loss_ref(logits, targets))
    assert jnp.allclose(out, ref, atol=1e-5, rtol=1e-4), (out, ref)

    # Extra shapes exercising: ragged rows, spatial fold, full-extent odd lane
    # width, divisor spatial tiles, and the masked ragged-tail path.
    for shape in [(3, 5, 18, 14), (1, 2, 64, 64), (2, 4, 25, 100),
                  (1, 1, 96, 96), (1, 1, 100, 130)]:
        k1, k2, key = jax.random.split(key, 3)
        lg = jax.random.normal(k1, shape, dtype=jnp.float32)
        tg = (jax.random.uniform(k2, shape) > 0.5).astype(jnp.float32)
        o = jax.block_until_ready(dice_loss(lg, tg))
        r = jax.block_until_ready(dice_loss_ref(lg, tg))
        assert jnp.allclose(o, r, atol=1e-5, rtol=1e-4), (shape, o, r)

    print("KERNEL_OK")
</pallas_src>

<mosaic_0001>
module attributes {stable_mosaic.version = 11 : i64} {
  func.func @_dice_kernel(%arg0: i32, %arg1: i32, %arg2: memref<8x256xf32, #tpu.memory_space<vmem>>, %arg3: memref<8x256xf32, #tpu.memory_space<vmem>>, %arg4: memref<8x128xf32, #tpu.memory_space<vmem>>, %arg5: memref<8x128xf32, #tpu.memory_space<vmem>>, %arg6: memref<8x128xf32, #tpu.memory_space<vmem>>, %arg7: memref<8x128xf32, #tpu.memory_space<vmem>>) attributes {dimension_semantics = [#tpu.dimension_semantics<parallel>, #tpu.dimension_semantics<arbitrary>], iteration_bounds = array<i64: 1, 1>, scalar_prefetch = 0 : i64, scratch_operands = 2 : i64, tpu.core_type = #tpu.core_type<tc>, window_params = [{transform_indices = @transform_0, window_bounds = array<i64: 8, 256>}, {transform_indices = @transform_1, window_bounds = array<i64: 8, 256>}, {transform_indices = @transform_2, window_bounds = array<i64: 8, 128>}, {transform_indices = @transform_3, window_bounds = array<i64: 8, 128>}]} {
    %c0_i32 = arith.constant 0 : i32
    %0 = arith.cmpi eq, %arg1, %c0_i32 : i32
    %1 = arith.extui %0 : i1 to i32
    %c0_i32_0 = arith.constant 0 : i32
    %2 = arith.cmpi ne, %1, %c0_i32_0 : i32
    scf.if %2 {
      %cst_16 = arith.constant 0.000000e+00 : f32
      %29 = vector.broadcast %cst_16 : f32 to vector<8x128xf32>
      %c0_17 = arith.constant 0 : index
      %c0_18 = arith.constant 0 : index
      %30 = vector.load %arg6[%c0_17, %c0_18] : memref<8x128xf32, #tpu.memory_space<vmem>>, vector<8x128xf32>
      tpu.vector_store %arg6[%c0_17, %c0_18], %29 {strides = array<i32>} : memref<8x128xf32, #tpu.memory_space<vmem>>, vector<8x128xf32>,
      %cst_19 = arith.constant 0.000000e+00 : f32
      %31 = vector.broadcast %cst_19 : f32 to vector<8x128xf32>
      %c0_20 = arith.constant 0 : index
      %c0_21 = arith.constant 0 : index
      %32 = vector.load %arg7[%c0_20, %c0_21] : memref<8x128xf32, #tpu.memory_space<vmem>>, vector<8x128xf32>
      tpu.vector_store %arg7[%c0_20, %c0_21], %31 {strides = array<i32>} : memref<8x128xf32, #tpu.memory_space<vmem>>, vector<8x128xf32>,
    } else {
    }
    %c0 = arith.constant 0 : index
    %c0_1 = arith.constant 0 : index
    %3 = vector.load %arg2[%c0, %c0_1] : memref<8x256xf32, #tpu.memory_space<vmem>>, vector<8x256xf32>
    %cst = arith.constant 5.000000e-01 : f32
    %4 = vector.broadcast %cst : f32 to vector<8x256xf32>
    %5 = arith.mulf %4, %3 : vector<8x256xf32>
    %6 = math.tanh %5 : vector<8x256xf32>
    %cst_2 = arith.constant 1.000000e+00 : f32
    %7 = vector.broadcast %cst_2 : f32 to vector<8x256xf32>
    %8 = arith.addf %6, %7 : vector<8x256xf32>
    %cst_3 = arith.constant 5.000000e-01 : f32
    %9 = vector.broadcast %cst_3 : f32 to vector<8x256xf32>
    %10 = arith.mulf %9, %8 : vector<8x256xf32>
    %c0_4 = arith.constant 0 : index
    %c0_5 = arith.constant 0 : index
    %11 = vector.load %arg3[%c0_4, %c0_5] : memref<8x256xf32, #tpu.memory_space<vmem>>, vector<8x256xf32>
    %c0_6 = arith.constant 0 : index
    %c0_7 = arith.constant 0 : index
    %12 = vector.load %arg6[%c0_6, %c0_7] : memref<8x128xf32, #tpu.memory_space<vmem>>, vector<8x128xf32>
    %13 = arith.mulf %10, %11 : vector<8x256xf32>
    %14 = vector.extract_strided_slice %13 {offsets = [0, 0], sizes = [8, 128], strides = [1, 1]} : vector<8x256xf32> to vector<8x128xf32>
    %15 = vector.extract_strided_slice %13 {offsets = [0, 128], sizes = [8, 128], strides = [1, 1]} : vector<8x256xf32> to vector<8x128xf32>
    %16 = arith.addf %14, %15 : vector<8x128xf32>
    %17 = arith.addf %12, %16 : vector<8x128xf32>
    %c0_8 = arith.constant 0 : index
    %c0_9 = arith.constant 0 : index
    %18 = vector.load %arg6[%c0_8, %c0_9] : memref<8x128xf32, #tpu.memory_space<vmem>>, vector<8x128xf32>
    tpu.vector_store %arg6[%c0_8, %c0_9], %17 {strides = array<i32>} : memref<8x128xf32, #tpu.memory_space<vmem>>, vector<8x128xf32>,
    %c0_10 = arith.constant 0 : index
    %c0_11 = arith.constant 0 : index
    %19 = vector.load %arg7[%c0_10, %c0_11] : memref<8x128xf32, #tpu.memory_space<vmem>>, vector<8x128xf32>
    %20 = arith.addf %10, %11 : vector<8x256xf32>
    %21 = vector.extract_strided_slice %20 {offsets = [0, 0], sizes = [8, 128], strides = [1, 1]} : vector<8x256xf32> to vector<8x128xf32>
    %22 = vector.extract_strided_slice %20 {offsets = [0, 128], sizes = [8, 128], strides = [1, 1]} : vector<8x256xf32> to vector<8x128xf32>
    %23 = arith.addf %21, %22 : vector<8x128xf32>
    %24 = arith.addf %19, %23 : vector<8x128xf32>
    %c0_12 = arith.constant 0 : index
    %c0_13 = arith.constant 0 : index
    %25 = vector.load %arg7[%c0_12, %c0_13] : memref<8x128xf32, #tpu.memory_space<vmem>>, vector<8x128xf32>
    tpu.vector_store %arg7[%c0_12, %c0_13], %24 {strides = array<i32>} : memref<8x128xf32, #tpu.memory_space<vmem>>, vector<8x128xf32>,
    %c0_i32_14 = arith.constant 0 : i32
    %26 = arith.cmpi eq, %arg1, %c0_i32_14 : i32
    %27 = arith.extui %26 : i1 to i32
    %c0_i32_15 = arith.constant 0 : i32
    %28 = arith.cmpi ne, %27, %c0_i32_15 : i32
    scf.if %28 {
      %c0_16 = arith.constant 0 : index
      %c0_17 = arith.constant 0 : index
      %29 = vector.load %arg6[%c0_16, %c0_17] : memref<8x128xf32, #tpu.memory_space<vmem>>, vector<8x128xf32>
      %c0_18 = arith.constant 0 : index
      %c0_19 = arith.constant 0 : index
      %30 = vector.load %arg4[%c0_18, %c0_19] : memref<8x128xf32, #tpu.memory_space<vmem>>, vector<8x128xf32>
      tpu.vector_store %arg4[%c0_18, %c0_19], %29 {strides = array<i32>} : memref<8x128xf32, #tpu.memory_space<vmem>>, vector<8x128xf32>,
      %c0_20 = arith.constant 0 : index
      %c0_21 = arith.constant 0 : index
      %31 = vector.load %arg7[%c0_20, %c0_21] : memref<8x128xf32, #tpu.memory_space<vmem>>, vector<8x128xf32>
      %c0_22 = arith.constant 0 : index
      %c0_23 = arith.constant 0 : index
      %32 = vector.load %arg5[%c0_22, %c0_23] : memref<8x128xf32, #tpu.memory_space<vmem>>, vector<8x128xf32>
      tpu.vector_store %arg5[%c0_22, %c0_23], %31 {strides = array<i32>} : memref<8x128xf32, #tpu.memory_space<vmem>>, vector<8x128xf32>,
    } else {
    }
    return
  }
  func.func @transform_0(%arg0: i32, %arg1: i32) -> (i32, i32) {
    %c0_i32 = arith.constant 0 : i32
    return %arg0, %arg1 : i32, i32
  }
  func.func @transform_1(%arg0: i32, %arg1: i32) -> (i32, i32) {
    %c0_i32 = arith.constant 0 : i32
    return %arg0, %arg1 : i32, i32
  }
  func.func @transform_2(%arg0: i32, %arg1: i32) -> (i32, i32) {
    %c0_i32 = arith.constant 0 : i32
    %c0_i32_0 = arith.constant 0 : i32
    return %arg0, %c0_i32 : i32, i32
  }
  func.func @transform_3(%arg0: i32, %arg1: i32) -> (i32, i32) {
    %c0_i32 = arith.constant 0 : i32
    %c0_i32_0 = arith.constant 0 : i32
    return %arg0, %c0_i32 : i32, i32
  }
}

</mosaic_0001>

<llo_original>
// kernel: tpu_custom_call.1
$region0: #{tpu_custom_call.1}
  #allocation0 [shape = 'u32[]', space=smem, size = 0x4, offset = 0x4, fixed_abs, tag = 'smem constant byte address 0x4 - core index']
  #allocation1 [shape = 'u32[72,128]{1,0:T(1,128)}', space=vmem, size = 0x9000, scoped, tag = 'internal scratch']
  #allocation2 [shape = 'f32[8,128]{1,0:T(8,128)}', space=vmem, size = 0x1000, scoped, tag = 'scratch operand']
  #allocation3 [shape = 'f32[8,128]{1,0:T(8,128)}', space=vmem, size = 0x1000, scoped, tag = 'scratch operand']
  %s0 = inlined_call_operand.hbm [shape: f32[8,256], index: 0, kind: input, shape index: {}]
  %s1 = inlined_call_operand.hbm [shape: f32[8,256], index: 1, kind: input, shape index: {}]
  %s2 = inlined_call_operand.hbm [shape: f32[8,128], index: 2, kind: output, shape index: {0}]
  %s3 = inlined_call_operand.hbm [shape: f32[8,128], index: 3, kind: output, shape index: {1}]
  %4 = xla_tuple %s2, %s3
  %s5 = sld [smem:[#allocation0]]
  $region42: #{tpu_custom_call.1} parent=0
    _
  %s7 = ssub.s32 1, %s5
  %s8 = scalar_select 0, %s7, %s5
  $region1: #{tpu_custom_call.1} parent=0
    #allocation4 [shape = 'u8[8192]{0}', space=vmem, size = 0x2000, scoped, tag = 'input window, operand 0, single buffered']
    #allocation5 [shape = 's32[1]{0}', space=sflag, size = 0x4, scoped, tag = 'scoped memory for tpu_custom_call.1']
    #allocation6 [shape = 's32[1]{0}', space=sflag, size = 0x4, scoped, tag = 'scoped memory for tpu_custom_call.1']
    #allocation7 [shape = 'u8[8192]{0}', space=vmem, size = 0x2000, scoped, tag = 'input window, operand 1, single buffered']
    #allocation8 [shape = 's32[1]{0}', space=sflag, size = 0x4, scoped, tag = 'scoped memory for tpu_custom_call.1']
    #allocation9 [shape = 'u8[4096]{0}', space=vmem, size = 0x1000, scoped, tag = 'output window, operand 0, single buffered']
    #allocation10 [shape = 'u8[4096]{0}', space=vmem, size = 0x1000, scoped, tag = 'output window, operand 1, single buffered']
    #allocation11 [shape = 's32[1]{0}', space=sflag, size = 0x4, scoped, tag = 'scoped memory for tpu_custom_call.1']
    %9 = vsyncpa [#allocation5], 0
    %10 = vsyncpa [#allocation8], 0
    %11 = vsyncpa [#allocation6], 0
    %12 = vsyncpa [#allocation11], 0
    // Predicated region
    $region2: #{tpu_custom_call.1} parent=1 // pred_check
      _
    $region3: #{tpu_custom_call.1} parent=1 // pred_check_branch
      %14 = sbr.rel (0) target = $region5
    $region4: #{tpu_custom_call.1} parent=1 // pred_region
      %16 = vsyncadd [#allocation5], 0
      %s18 = sshll.u32 %s0, 4
      %s19 = int_to_ptr.hbm [resolvable:$true] %s18
      %s20 = sshll.u32 [#allocation4], 4
      %s21 = int_to_ptr.vmem [resolvable:$true] %s20
      %23 = dma.hbm_to_vmem [thread:$0]  %s19, 256, %s21, [#allocation5]
    $region5: #{tpu_custom_call.1} parent=1 // pred_fallthru
      _
    // Predicated region
    $region6: #{tpu_custom_call.1} parent=1 // pred_check
      _
    $region7: #{tpu_custom_call.1} parent=1 // pred_check_branch
      %25 = sbr.rel (0) target = $region9
    $region8: #{tpu_custom_call.1} parent=1 // pred_region
      %27 = vsyncadd [#allocation8], 0
      %s29 = sshll.u32 %s1, 4
      %s30 = int_to_ptr.hbm [resolvable:$true] %s29
      %s31 = sshll.u32 [#allocation7], 4
      %s32 = int_to_ptr.vmem [resolvable:$true] %s31
      %34 = dma.hbm_to_vmem [thread:$0]  %s30, 256, %s32, [#allocation8]
    $region9: #{tpu_custom_call.1} parent=1 // pred_fallthru
      _
    // Predicated region
    $region10: #{tpu_custom_call.1} parent=1 // pred_check
      _
    $region11: #{tpu_custom_call.1} parent=1 // pred_check_branch
      %36 = sbr.rel (0) target = $region13
    $region12: #{tpu_custom_call.1} parent=1 // pred_region
      %38 = dma.done [#allocation5], 256
    $region13: #{tpu_custom_call.1} parent=1 // pred_fallthru
      _
    // Predicated region
    $region14: #{tpu_custom_call.1} parent=1 // pred_check
      _
    $region15: #{tpu_custom_call.1} parent=1 // pred_check_branch
      %40 = sbr.rel (0) target = $region17
    $region16: #{tpu_custom_call.1} parent=1 // pred_region
      %42 = dma.done [#allocation8], 256
    $region17: #{tpu_custom_call.1} parent=1 // pred_fallthru
      _
    %p43 = scmp.eq.s32.totalorder 0, 0
    // Predicated region
    $region18: #{tpu_custom_call.1} parent=1 // pred_check
      %p44 = pneg %p43
    $region19: #{tpu_custom_call.1} parent=1 // pred_check_branch
      %46 = sbr.rel (%p44) target = $region21
    $region20: #{tpu_custom_call.1} parent=1 // pred_region
      %47 = vst [vmem:[#allocation2] sm:$0xff] 0.0
      %48 = vst [vmem:[#allocation3] sm:$0xff] 0.0
    $region21: #{tpu_custom_call.1} parent=1 // pred_fallthru
      _
    %v49 = vld [vmem:[#allocation4] sm:$0xff]
    %v50 = vld [vmem:[#allocation4 + $0x8] sm:$0xff]
    %v51 = vmul.f32 %v49, 0.5
    %v52 = vmul.f32 %v50, 0.5
    %v53 = vtanh.pop %v51
    %v54 = vtanh.pop %v52
    %v55 = vadd.f32 %v53, 1.0
    %v56 = vadd.f32 %v54, 1.0
    %v57 = vmul.f32 %v55, 0.5
    %v58 = vmul.f32 %v56, 0.5
    %v59 = vld [vmem:[#allocation7] sm:$0xff]
    %v60 = vld [vmem:[#allocation7 + $0x8] sm:$0xff]
    %v61 = vld [vmem:[#allocation2] sm:$0xff]
    %v62 = vmul.f32 %v57, %v59
    %v63 = vmul.f32 %v58, %v60
    %v64 = vadd.f32 %v62, %v63
    %v65 = vadd.f32 %v61, %v64
    %66 = vst [vmem:[#allocation2] sm:$0xff] %v65
    %v67 = vld [vmem:[#allocation3] sm:$0xff]
    %v68 = vadd.f32 %v57, %v59
    %v69 = vadd.f32 %v58, %v60
    %v70 = vadd.f32 %v68, %v69
    %v71 = vadd.f32 %v67, %v70
    %72 = vst [vmem:[#allocation3] sm:$0xff] %v71
    // Predicated region
    $region22: #{tpu_custom_call.1} parent=1 // pred_check
      %p73 = pneg %p43
    $region23: #{tpu_custom_call.1} parent=1 // pred_check_branch
      %75 = sbr.rel (%p73) target = $region25
    $region24: #{tpu_custom_call.1} parent=1 // pred_region
      %v76 = vld [vmem:[#allocation2] sm:$0xff]
      %77 = vst [vmem:[#allocation9] sm:$0xff] %v76
      %v78 = vld [vmem:[#allocation3] sm:$0xff]
      %79 = vst [vmem:[#allocation10] sm:$0xff] %v78
    $region25: #{tpu_custom_call.1} parent=1 // pred_fallthru
      _
    // Predicated region
    $region26: #{tpu_custom_call.1} parent=1 // pred_check
      _
    $region27: #{tpu_custom_call.1} parent=1 // pred_check_branch
      %81 = sbr.rel (0) target = $region29
    $region28: #{tpu_custom_call.1} parent=1 // pred_region
      %83 = vsyncadd [#allocation6], 0
      %s85 = sshll.u32 [#allocation9], 4
      %s86 = int_to_ptr.vmem [resolvable:$true] %s85
      %s87 = sshll.u32 %s2, 4
      %s88 = int_to_ptr.hbm [resolvable:$true] %s87
      %90 = dma.vmem_to_hbm [thread:$0]  %s86, 128, %s88, [#allocation6]
    $region29: #{tpu_custom_call.1} parent=1 // pred_fallthru
      _
    // Predicated region
    $region30: #{tpu_custom_call.1} parent=1 // pred_check
      _
    $region31: #{tpu_custom_call.1} parent=1 // pred_check_branch
      %92 = sbr.rel (0) target = $region33
    $region32: #{tpu_custom_call.1} parent=1 // pred_region
      %94 = vsyncadd [#allocation11], 0
      %s96 = sshll.u32 [#allocation10], 4
      %s97 = int_to_ptr.vmem [resolvable:$true] %s96
      %s98 = sshll.u32 %s3, 4
      %s99 = int_to_ptr.hbm [resolvable:$true] %s98
      %101 = dma.vmem_to_hbm [thread:$0]  %s97, 128, %s99, [#allocation11]
    $region33: #{tpu_custom_call.1} parent=1 // pred_fallthru
      _
    // Predicated region
    $region34: #{tpu_custom_call.1} parent=1 // pred_check
      _
    $region35: #{tpu_custom_call.1} parent=1 // pred_check_branch
      %103 = sbr.rel (0) target = $region37
    $region36: #{tpu_custom_call.1} parent=1 // pred_region
      %105 = dma.done [#allocation6], 128
    $region37: #{tpu_custom_call.1} parent=1 // pred_fallthru
      _
    // Predicated region
    $region38: #{tpu_custom_call.1} parent=1 // pred_check
      _
    $region39: #{tpu_custom_call.1} parent=1 // pred_check_branch
      %107 = sbr.rel (0) target = $region41
    $region40: #{tpu_custom_call.1} parent=1 // pred_region
      %109 = dma.done [#allocation11], 128
    $region41: #{tpu_custom_call.1} parent=1 // pred_fallthru
      _
    %110 = vsyncpa [#allocation5], 1
    %111 = vsyncpa [#allocation8], 1
    %112 = vsyncpa [#allocation6], 1
    %113 = vsyncpa [#allocation11], 1

</llo_original>
